<compile_context>
chip_gen: v6e
topology: v6e:2x2x1
jax: 0.10.0
libtpu: 0.0.40
codegen_flags: <defaults>
</compile_context>

<pallas_src>
import jax
import jax.numpy as jnp
from jax import lax
from jax.experimental import pallas as pl
from jax.experimental.pallas import tpu as pltpu


def _round_up(x, m):
    return ((x + m - 1) // m) * m


def _layout(data_dim, latent_dim):
    """Row offsets of each layer inside the packed (out, in) weight / bias slabs.

    Feature-major packing: weights are stored (out_features, in_features) so the
    kernel computes y = W @ h with h carried as (features, batch).  enc1 and dec4
    are kept out of the middle slab so it never widens to D columns of zeros.
    All per-layer row offsets are 8-aligned (sublane-tile-aligned slices).
    """
    D, L = data_dim, latent_dim
    mid_layers = [
        ("enc2", 4, 4),
        ("enc3", 16, 4),
        ("head", 2 * L, 16),   # encoder_mu || encoder_logvar fused
        ("dec1", 16, L),
        ("dec2", 4, 16),
        ("dec3", 4, 4),
    ]
    mid_off, off = {}, 0
    for name, out_f, in_f in mid_layers:
        mid_off[name] = (off, out_f, in_f)
        off += _round_up(out_f, 8)
    mid_rows = off
    mid_in = max(in_f for _, _, in_f in mid_layers)

    bias_layers = [("enc1", 4), ("enc2", 4), ("enc3", 16), ("head", 2 * L),
                   ("dec1", 16), ("dec2", 4), ("dec3", 4), ("dec4", D)]
    b_off, off = {}, 0
    for name, out_f in bias_layers:
        b_off[name] = (off, out_f)
        off += _round_up(out_f, 8)
    b_rows = off
    return mid_off, mid_rows, mid_in, b_off, b_rows


def _make_vade_kernel(data_dim, latent_dim, mid_off, b_off):
    D, L = data_dim, latent_dim

    def kernel(x_ref, w1_ref, wm_ref, w4_ref, b_ref, eps_ref, out_ref):
        # All activations are feature-major (features, TB): batch on the lane axis,
        # so every VPU op and every store is lane-dense.
        def bias(name):
            off, out_f = b_off[name]
            return b_ref[off:off + out_f, 0:1]            # (out_f, 1) -> lane broadcast

        def mid(h, name):
            off, out_f, in_f = mid_off[name]
            w = wm_ref[off:off + out_f, 0:in_f]           # static (out_f, in_f) view
            return jnp.dot(w, h, preferred_element_type=jnp.float32) + bias(name)

        # ---- encoder ----
        # enc1: contract x's feature axis directly (x stays batch-major (TB, D));
        # rhs-transposed matmul -> output is already feature-major (4, TB).
        h = lax.dot_general(w1_ref[...], x_ref[...],
                            (((1,), (1,)), ((), ())),
                            preferred_element_type=jnp.float32) + bias("enc1")
        h = jnp.maximum(h, 0.0)
        h = jnp.maximum(mid(h, "enc2"), 0.0)
        h = jnp.maximum(mid(h, "enc3"), 0.0)

        # Fused mu||logvar head; the split is sublane-tile aligned when L % 8 == 0.
        mlv = mid(h, "head")                              # (2L, TB): [mu ; logvar]
        mu = mlv[0:L, :]
        logvar = mlv[L:2 * L, :]

        # ---- reparameterize: z = mu + eps * exp(0.5 * logvar) ----
        z = mu + eps_ref[...] * jnp.exp(0.5 * logvar)     # (L, TB)

        # ---- decoder ----
        d = jnp.maximum(mid(z, "dec1"), 0.0)
        d = jnp.maximum(mid(d, "dec2"), 0.0)
        d = jnp.maximum(mid(d, "dec3"), 0.0)
        logits = jnp.dot(w4_ref[...], d,
                         preferred_element_type=jnp.float32) + bias("dec4")
        recon = 1.0 / (1.0 + jnp.exp(-logits))            # exact sigmoid (not EUP-bound)

        # Fused feature-major output slab: [recon ; mu ; logvar], lane-dense stores,
        # 8-aligned sublane offsets (D % 8 == 0).
        out_ref[0:D, :] = recon.astype(out_ref.dtype)
        out_ref[D:D + 2 * L, :] = mlv.astype(out_ref.dtype)

    return kernel


def pack_vade_params(params, data_dim, latent_dim):
    """Pack weights into (out, in) slabs: enc1, middle stack, dec4, one bias column."""
    mid_off, mid_rows, mid_in, b_off, b_rows = _layout(data_dim, latent_dim)

    w_enc1 = params["ew1"].T                                                # (4, D)
    w_dec4 = params["dw4"].T                                                # (D, 4)

    per_mid = {
        "enc2": params["ew2"].T,
        "enc3": params["ew3"].T,
        "head": jnp.concatenate([params["wmu"], params["wlv"]], axis=1).T,  # (2L, 16)
        "dec1": params["dw1"].T,
        "dec2": params["dw2"].T,
        "dec3": params["dw3"].T,
    }
    w_mid = jnp.zeros((mid_rows, mid_in), jnp.float32)
    for name, (off, out_f, in_f) in mid_off.items():
        w_mid = w_mid.at[off:off + out_f, 0:in_f].set(per_mid[name])

    per_b = {
        "enc1": params["eb1"], "enc2": params["eb2"], "enc3": params["eb3"],
        "head": jnp.concatenate([params["bmu"], params["blv"]], axis=1),
        "dec1": params["db1"], "dec2": params["db2"], "dec3": params["db3"],
        "dec4": params["db4"],
    }
    b_pack = jnp.zeros((b_rows, 1), jnp.float32)
    for name, (off, out_f) in b_off.items():
        b_pack = b_pack.at[off:off + out_f, 0].set(per_b[name][0])
    return w_enc1, w_mid, w_dec4, b_pack


def init_vade_params(key, n_classes, data_dim, latent_dim):
    """Deterministic synthetic parameters (same shapes as the PyTorch module)."""
    keys = jax.random.split(key, 32)
    ki = iter(range(32))

    def linear(in_f, out_f):
        bound = 1.0 / jnp.sqrt(jnp.float32(in_f))
        w = jax.random.uniform(keys[next(ki)], (in_f, out_f), jnp.float32, -bound, bound)
        b = jax.random.uniform(keys[next(ki)], (1, out_f), jnp.float32, -bound, bound)
        return w, b

    p = {}
    # GMM prior params (unused by forward, kept for shape parity).
    p["_pi"] = jnp.zeros((n_classes,), jnp.float32)
    p["gmm_mu"] = jax.random.normal(keys[next(ki)], (n_classes, latent_dim), jnp.float32)
    p["gmm_logvar"] = jax.random.normal(keys[next(ki)], (n_classes, latent_dim), jnp.float32)
    # Encoder.
    p["ew1"], p["eb1"] = linear(data_dim, 4)
    p["ew2"], p["eb2"] = linear(4, 4)
    p["ew3"], p["eb3"] = linear(4, 16)
    p["wmu"], p["bmu"] = linear(16, latent_dim)
    p["wlv"], p["blv"] = linear(16, latent_dim)
    # Decoder.
    p["dw1"], p["db1"] = linear(latent_dim, 16)
    p["dw2"], p["db2"] = linear(16, 4)
    p["dw3"], p["db3"] = linear(4, 4)
    p["dw4"], p["db4"] = linear(4, data_dim)
    return p


def _choose_batch_tile(B, D, L, batch_tile):
    """Pick (tb, padded_B).

    Small batches run as ONE full-extent block (no padding, full-dim blocks so no
    (8,128) alignment constraints).  Large batches use a 128-multiple lane tile
    giving >= 2 grid steps (pipelined; shards across both TCs on v7x), capped by
    batch_tile and by a VMEM budget so double-buffered x/eps/out tiles stay well
    under the scoped-VMEM default even at MNIST-sized D on v7x.
    """
    if B <= 512:
        return B, B
    half = max(128, ((B + 1) // 2) // 128 * 128)          # >= 2 grid steps
    tb = max(128, min(batch_tile, half))
    bytes_per_row = 4 * (D + (D + 2 * L) + L) * 2          # x + out + eps, double-buffered
    vmem_rows = max(128, (16 * 1024 * 1024 // bytes_per_row) // 128 * 128)
    tb = min(tb, vmem_rows)
    return tb, _round_up(B, tb)


def vade_forward(x, params, eps_t, *, batch_tile=2048):
    """VaDE forward pass.

    x:     (B, data_dim) f32
    eps_t: (latent_dim, B) f32 standard-normal noise (feature-major)
    Returns (recon, mu, logvar), each (B, ...) like the PyTorch module.
    """
    B, D = x.shape
    L = eps_t.shape[0]
    mid_off, mid_rows, mid_in, b_off, b_rows = _layout(D, L)
    w_enc1, w_mid, w_dec4, b_pack = pack_vade_params(params, D, L)

    tb, b_pad = _choose_batch_tile(B, D, L, batch_tile)
    if b_pad != B:
        # TODO(synk): replace the tail pad with an in-kernel masked store for ragged B.
        x = jnp.pad(x, ((0, b_pad - B), (0, 0)))
        eps_t = jnp.pad(eps_t, ((0, 0), (0, b_pad - B)))

    out_rows = D + 2 * L
    kernel = _make_vade_kernel(D, L, mid_off, b_off)

    out = pl.pallas_call(
        kernel,
        out_shape=jax.ShapeDtypeStruct((out_rows, b_pad), jnp.float32),
        grid=(b_pad // tb,),
        in_specs=[
            pl.BlockSpec((tb, D), lambda i: (i, 0)),             # x, tiled over batch
            pl.BlockSpec((4, D), lambda i: (0, 0)),              # enc1 W (resident)
            pl.BlockSpec((mid_rows, mid_in), lambda i: (0, 0)),  # middle W slab (resident)
            pl.BlockSpec((D, 4), lambda i: (0, 0)),              # dec4 W (resident)
            pl.BlockSpec((b_rows, 1), lambda i: (0, 0)),         # bias column (resident)
            pl.BlockSpec((L, tb), lambda i: (0, i)),             # eps, feature-major
        ],
        out_specs=pl.BlockSpec((out_rows, tb), lambda i: (0, i)),  # [recon ; mu ; logvar]
        compiler_params=pltpu.CompilerParams(
            dimension_semantics=("parallel",),                    # batch shards across TCs
        ),
    )(x, w_enc1, w_mid, w_dec4, b_pack, eps_t)

    recon = out[0:D, 0:B].T
    mu = out[D:D + L, 0:B].T
    logvar = out[D + L:D + 2 * L, 0:B].T
    return recon, mu, logvar


def vade_forward_ref(x, params, eps_t):
    """Plain-JAX reference for correctness checking (eps_t is (L, B))."""
    def lin(h, w, b):
        return h @ w + b

    h = jax.nn.relu(lin(x, params["ew1"], params["eb1"]))
    h = jax.nn.relu(lin(h, params["ew2"], params["eb2"]))
    h = jax.nn.relu(lin(h, params["ew3"], params["eb3"]))
    mu = lin(h, params["wmu"], params["bmu"])
    logvar = lin(h, params["wlv"], params["blv"])
    z = mu + eps_t.T * jnp.exp(0.5 * logvar)
    d = jax.nn.relu(lin(z, params["dw1"], params["db1"]))
    d = jax.nn.relu(lin(d, params["dw2"], params["db2"]))
    d = jax.nn.relu(lin(d, params["dw3"], params["db3"]))
    recon = jax.nn.sigmoid(lin(d, params["dw4"], params["db4"]))
    return recon, mu, logvar


def _check(recon, mu, logvar, recon_r, mu_r, logvar_r):
    assert jnp.allclose(mu, mu_r, atol=1e-5, rtol=1e-5)
    assert jnp.allclose(logvar, logvar_r, atol=1e-5, rtol=1e-5)
    assert jnp.allclose(recon, recon_r, atol=1e-4, rtol=1e-4)


if __name__ == "__main__":
    N_CLASSES, DATA_DIM, LATENT_DIM = 10, 32, 8

    key = jax.random.PRNGKey(0)
    k_param, k_x, k_eps = jax.random.split(key, 3)
    params = init_vade_params(k_param, N_CLASSES, DATA_DIM, LATENT_DIM)

    # 1) Small batch: single full-extent block, no padding.
    B = 8
    x = jax.random.uniform(k_x, (B, DATA_DIM), jnp.float32)
    eps_t = jax.random.normal(k_eps, (LATENT_DIM, B), jnp.float32)   # torch.randn_like
    recon, mu, logvar = vade_forward(x, params, eps_t)
    jax.block_until_ready((recon, mu, logvar))
    _check(recon, mu, logvar, *vade_forward_ref(x, params, eps_t))

    # 2) Larger batch: multi-step batch grid (pipelined / megacore-shardable), no pad.
    B2 = 1536
    k_x2, k_eps2 = jax.random.split(jax.random.PRNGKey(1))
    x2 = jax.random.uniform(k_x2, (B2, DATA_DIM), jnp.float32)
    eps2 = jax.random.normal(k_eps2, (LATENT_DIM, B2), jnp.float32)
    r2, m2, lv2 = vade_forward(x2, params, eps2)
    jax.block_until_ready((r2, m2, lv2))
    _check(r2, m2, lv2, *vade_forward_ref(x2, params, eps2))

    # 3) Ragged large batch: exercises the padded multi-step path.
    B3 = 700
    k_x3, k_eps3 = jax.random.split(jax.random.PRNGKey(2))
    x3 = jax.random.uniform(k_x3, (B3, DATA_DIM), jnp.float32)
    eps3 = jax.random.normal(k_eps3, (LATENT_DIM, B3), jnp.float32)
    r3, m3, lv3 = vade_forward(x3, params, eps3)
    jax.block_until_ready((r3, m3, lv3))
    _check(r3, m3, lv3, *vade_forward_ref(x3, params, eps3))

    print("KERNEL_OK")
</pallas_src>

<mosaic_0001>
module attributes {stable_mosaic.version = 11 : i64} {
  func.func @kernel(%arg0: i32, %arg1: memref<8x32xf32, #tpu.memory_space<vmem>>, %arg2: memref<4x32xf32, #tpu.memory_space<vmem>>, %arg3: memref<72x16xf32, #tpu.memory_space<vmem>>, %arg4: memref<32x4xf32, #tpu.memory_space<vmem>>, %arg5: memref<112x1xf32, #tpu.memory_space<vmem>>, %arg6: memref<8x8xf32, #tpu.memory_space<vmem>>, %arg7: memref<48x8xf32, #tpu.memory_space<vmem>>) attributes {dimension_semantics = [#tpu.dimension_semantics<parallel>], iteration_bounds = array<i64: 1>, scalar_prefetch = 0 : i64, scratch_operands = 0 : i64, tpu.core_type = #tpu.core_type<tc>, window_params = [{transform_indices = @transform_0, window_bounds = array<i64: 8, 32>}, {pipeline_mode = #tpu.pipeline_mode<synchronous>, transform_indices = @transform_1, window_bounds = array<i64: 4, 32>}, {pipeline_mode = #tpu.pipeline_mode<synchronous>, transform_indices = @transform_2, window_bounds = array<i64: 72, 16>}, {pipeline_mode = #tpu.pipeline_mode<synchronous>, transform_indices = @transform_3, window_bounds = array<i64: 32, 4>}, {pipeline_mode = #tpu.pipeline_mode<synchronous>, transform_indices = @transform_4, window_bounds = array<i64: 112, 1>}, {transform_indices = @transform_5, window_bounds = array<i64: 8, 8>}, {transform_indices = @transform_6, window_bounds = array<i64: 48, 8>}]} {
    %c0 = arith.constant 0 : index
    %c0_0 = arith.constant 0 : index
    %0 = vector.load %arg2[%c0, %c0_0] : memref<4x32xf32, #tpu.memory_space<vmem>>, vector<4x32xf32>
    %c0_1 = arith.constant 0 : index
    %c0_2 = arith.constant 0 : index
    %1 = vector.load %arg1[%c0_1, %c0_2] : memref<8x32xf32, #tpu.memory_space<vmem>>, vector<8x32xf32>
    %cst = arith.constant dense<0.000000e+00> : vector<4x8xf32>
    %2 = tpu.matmul %0, %1, %cst {dimension_numbers = #tpu.dot_dimension_numbers<[1], [1], [0], [0], [0, 0, 1, 0], [], []>} : vector<4x32xf32>, vector<8x32xf32>, vector<4x8xf32> -> vector<4x8xf32>
    %c0_3 = arith.constant 0 : index
    %c0_4 = arith.constant 0 : index
    %3 = vector.load %arg5[%c0_3, %c0_4] : memref<112x1xf32, #tpu.memory_space<vmem>>, vector<4x1xf32>
    %4 = vector.broadcast %3 : vector<4x1xf32> to vector<4x8xf32>
    %5 = arith.addf %2, %4 : vector<4x8xf32>
    %cst_5 = arith.constant 0.000000e+00 : f32
    %6 = vector.broadcast %cst_5 : f32 to vector<4x8xf32>
    %7 = arith.maximumf %5, %6 : vector<4x8xf32>
    %c0_6 = arith.constant 0 : index
    %c0_7 = arith.constant 0 : index
    %8 = vector.load %arg3[%c0_6, %c0_7] : memref<72x16xf32, #tpu.memory_space<vmem>>, vector<4x4xf32>
    %cst_8 = arith.constant dense<0.000000e+00> : vector<4x8xf32>
    %9 = tpu.matmul %8, %7, %cst_8 {dimension_numbers = #tpu.dot_dimension_numbers<[1], [0], [0], [1], [0, 0, 1, 1], [], []>} : vector<4x4xf32>, vector<4x8xf32>, vector<4x8xf32> -> vector<4x8xf32>
    %c8 = arith.constant 8 : index
    %c0_9 = arith.constant 0 : index
    %10 = vector.load %arg5[%c8, %c0_9] : memref<112x1xf32, #tpu.memory_space<vmem>>, vector<4x1xf32>
    %11 = vector.broadcast %10 : vector<4x1xf32> to vector<4x8xf32>
    %12 = arith.addf %9, %11 : vector<4x8xf32>
    %cst_10 = arith.constant 0.000000e+00 : f32
    %13 = vector.broadcast %cst_10 : f32 to vector<4x8xf32>
    %14 = arith.maximumf %12, %13 : vector<4x8xf32>
    %c8_11 = arith.constant 8 : index
    %c0_12 = arith.constant 0 : index
    %15 = vector.load %arg3[%c8_11, %c0_12] : memref<72x16xf32, #tpu.memory_space<vmem>>, vector<16x4xf32>
    %cst_13 = arith.constant dense<0.000000e+00> : vector<16x8xf32>
    %16 = tpu.matmul %15, %14, %cst_13 {dimension_numbers = #tpu.dot_dimension_numbers<[1], [0], [0], [1], [0, 0, 1, 1], [], []>} : vector<16x4xf32>, vector<4x8xf32>, vector<16x8xf32> -> vector<16x8xf32>
    %c16 = arith.constant 16 : index
    %c0_14 = arith.constant 0 : index
    %17 = vector.load %arg5[%c16, %c0_14] : memref<112x1xf32, #tpu.memory_space<vmem>>, vector<16x1xf32>
    %18 = vector.broadcast %17 : vector<16x1xf32> to vector<16x8xf32>
    %19 = arith.addf %16, %18 : vector<16x8xf32>
    %cst_15 = arith.constant 0.000000e+00 : f32
    %20 = vector.broadcast %cst_15 : f32 to vector<16x8xf32>
    %21 = arith.maximumf %19, %20 : vector<16x8xf32>
    %c24 = arith.constant 24 : index
    %c0_16 = arith.constant 0 : index
    %22 = vector.load %arg3[%c24, %c0_16] : memref<72x16xf32, #tpu.memory_space<vmem>>, vector<16x16xf32>
    %cst_17 = arith.constant dense<0.000000e+00> : vector<16x8xf32>
    %23 = tpu.matmul %22, %21, %cst_17 {dimension_numbers = #tpu.dot_dimension_numbers<[1], [0], [0], [1], [0, 0, 1, 1], [], []>} : vector<16x16xf32>, vector<16x8xf32>, vector<16x8xf32> -> vector<16x8xf32>
    %c32 = arith.constant 32 : index
    %c0_18 = arith.constant 0 : index
    %24 = vector.load %arg5[%c32, %c0_18] : memref<112x1xf32, #tpu.memory_space<vmem>>, vector<16x1xf32>
    %25 = vector.broadcast %24 : vector<16x1xf32> to vector<16x8xf32>
    %26 = arith.addf %23, %25 : vector<16x8xf32>
    %27 = vector.extract_strided_slice %26 {offsets = [0, 0], sizes = [8, 8], strides = [1, 1]} : vector<16x8xf32> to vector<8x8xf32>
    %28 = vector.extract_strided_slice %26 {offsets = [8, 0], sizes = [8, 8], strides = [1, 1]} : vector<16x8xf32> to vector<8x8xf32>
    %c0_19 = arith.constant 0 : index
    %c0_20 = arith.constant 0 : index
    %29 = vector.load %arg6[%c0_19, %c0_20] : memref<8x8xf32, #tpu.memory_space<vmem>>, vector<8x8xf32>
    %cst_21 = arith.constant 5.000000e-01 : f32
    %30 = vector.broadcast %cst_21 : f32 to vector<8x8xf32>
    %31 = arith.mulf %30, %28 : vector<8x8xf32>
    %32 = math.exp %31 : vector<8x8xf32>
    %33 = arith.mulf %29, %32 : vector<8x8xf32>
    %34 = arith.addf %27, %33 : vector<8x8xf32>
    %c40 = arith.constant 40 : index
    %c0_22 = arith.constant 0 : index
    %35 = vector.load %arg3[%c40, %c0_22] : memref<72x16xf32, #tpu.memory_space<vmem>>, vector<16x8xf32>
    %cst_23 = arith.constant dense<0.000000e+00> : vector<16x8xf32>
    %36 = tpu.matmul %35, %34, %cst_23 {dimension_numbers = #tpu.dot_dimension_numbers<[1], [0], [0], [1], [0, 0, 1, 1], [], []>} : vector<16x8xf32>, vector<8x8xf32>, vector<16x8xf32> -> vector<16x8xf32>
    %c48 = arith.constant 48 : index
    %c0_24 = arith.constant 0 : index
    %37 = vector.load %arg5[%c48, %c0_24] : memref<112x1xf32, #tpu.memory_space<vmem>>, vector<16x1xf32>
    %38 = vector.broadcast %37 : vector<16x1xf32> to vector<16x8xf32>
    %39 = arith.addf %36, %38 : vector<16x8xf32>
    %cst_25 = arith.constant 0.000000e+00 : f32
    %40 = vector.broadcast %cst_25 : f32 to vector<16x8xf32>
    %41 = arith.maximumf %39, %40 : vector<16x8xf32>
    %c56 = arith.constant 56 : index
    %c0_26 = arith.constant 0 : index
    %42 = vector.load %arg3[%c56, %c0_26] : memref<72x16xf32, #tpu.memory_space<vmem>>, vector<4x16xf32>
    %cst_27 = arith.constant dense<0.000000e+00> : vector<4x8xf32>
    %43 = tpu.matmul %42, %41, %cst_27 {dimension_numbers = #tpu.dot_dimension_numbers<[1], [0], [0], [1], [0, 0, 1, 1], [], []>} : vector<4x16xf32>, vector<16x8xf32>, vector<4x8xf32> -> vector<4x8xf32>
    %c64 = arith.constant 64 : index
    %c0_28 = arith.constant 0 : index
    %44 = vector.load %arg5[%c64, %c0_28] : memref<112x1xf32, #tpu.memory_space<vmem>>, vector<4x1xf32>
    %45 = vector.broadcast %44 : vector<4x1xf32> to vector<4x8xf32>
    %46 = arith.addf %43, %45 : vector<4x8xf32>
    %cst_29 = arith.constant 0.000000e+00 : f32
    %47 = vector.broadcast %cst_29 : f32 to vector<4x8xf32>
    %48 = arith.maximumf %46, %47 : vector<4x8xf32>
    %c64_30 = arith.constant 64 : index
    %c0_31 = arith.constant 0 : index
    %49 = vector.load %arg3[%c64_30, %c0_31] : memref<72x16xf32, #tpu.memory_space<vmem>>, vector<4x4xf32>
    %cst_32 = arith.constant dense<0.000000e+00> : vector<4x8xf32>
    %50 = tpu.matmul %49, %48, %cst_32 {dimension_numbers = #tpu.dot_dimension_numbers<[1], [0], [0], [1], [0, 0, 1, 1], [], []>} : vector<4x4xf32>, vector<4x8xf32>, vector<4x8xf32> -> vector<4x8xf32>
    %c72 = arith.constant 72 : index
    %c0_33 = arith.constant 0 : index
    %51 = vector.load %arg5[%c72, %c0_33] : memref<112x1xf32, #tpu.memory_space<vmem>>, vector<4x1xf32>
    %52 = vector.broadcast %51 : vector<4x1xf32> to vector<4x8xf32>
    %53 = arith.addf %50, %52 : vector<4x8xf32>
    %cst_34 = arith.constant 0.000000e+00 : f32
    %54 = vector.broadcast %cst_34 : f32 to vector<4x8xf32>
    %55 = arith.maximumf %53, %54 : vector<4x8xf32>
    %c0_35 = arith.constant 0 : index
    %c0_36 = arith.constant 0 : index
    %56 = vector.load %arg4[%c0_35, %c0_36] : memref<32x4xf32, #tpu.memory_space<vmem>>, vector<32x4xf32>
    %cst_37 = arith.constant dense<0.000000e+00> : vector<32x8xf32>
    %57 = tpu.matmul %56, %55, %cst_37 {dimension_numbers = #tpu.dot_dimension_numbers<[1], [0], [0], [1], [0, 0, 1, 1], [], []>} : vector<32x4xf32>, vector<4x8xf32>, vector<32x8xf32> -> vector<32x8xf32>
    %c80 = arith.constant 80 : index
    %c0_38 = arith.constant 0 : index
    %58 = vector.load %arg5[%c80, %c0_38] : memref<112x1xf32, #tpu.memory_space<vmem>>, vector<32x1xf32>
    %59 = vector.broadcast %58 : vector<32x1xf32> to vector<32x8xf32>
    %60 = arith.addf %57, %59 : vector<32x8xf32>
    %cst_39 = arith.constant 0.000000e+00 : f32
    %61 = vector.broadcast %cst_39 : f32 to vector<32x8xf32>
    %62 = arith.subf %61, %60 : vector<32x8xf32>
    %63 = math.exp %62 : vector<32x8xf32>
    %cst_40 = arith.constant 1.000000e+00 : f32
    %64 = vector.broadcast %cst_40 : f32 to vector<32x8xf32>
    %65 = arith.addf %64, %63 : vector<32x8xf32>
    %cst_41 = arith.constant 1.000000e+00 : f32
    %66 = vector.broadcast %cst_41 : f32 to vector<32x8xf32>
    %67 = arith.divf %66, %65 : vector<32x8xf32>
    %c0_42 = arith.constant 0 : index
    %c0_43 = arith.constant 0 : index
    %68 = vector.load %arg7[%c0_42, %c0_43] : memref<48x8xf32, #tpu.memory_space<vmem>>, vector<32x8xf32>
    tpu.vector_store %arg7[%c0_42, %c0_43], %67 {strides = array<i32>} : memref<48x8xf32, #tpu.memory_space<vmem>>, vector<32x8xf32>,
    %c32_44 = arith.constant 32 : index
    %c0_45 = arith.constant 0 : index
    %69 = vector.load %arg7[%c32_44, %c0_45] : memref<48x8xf32, #tpu.memory_space<vmem>>, vector<16x8xf32>
    tpu.vector_store %arg7[%c32_44, %c0_45], %26 {strides = array<i32>} : memref<48x8xf32, #tpu.memory_space<vmem>>, vector<16x8xf32>,
    return
  }
  func.func @transform_0(%arg0: i32) -> (i32, i32) {
    %c0_i32 = arith.constant 0 : i32
    %c0_i32_0 = arith.constant 0 : i32
    return %arg0, %c0_i32 : i32, i32
  }
  func.func @transform_1(%arg0: i32) -> (i32, i32) {
    %c0_i32 = arith.constant 0 : i32
    %c0_i32_0 = arith.constant 0 : i32
    %c0_i32_1 = arith.constant 0 : i32
    return %c0_i32, %c0_i32_0 : i32, i32
  }
  func.func @transform_2(%arg0: i32) -> (i32, i32) {
    %c0_i32 = arith.constant 0 : i32
    %c0_i32_0 = arith.constant 0 : i32
    %c0_i32_1 = arith.constant 0 : i32
    return %c0_i32, %c0_i32_0 : i32, i32
  }
  func.func @transform_3(%arg0: i32) -> (i32, i32) {
    %c0_i32 = arith.constant 0 : i32
    %c0_i32_0 = arith.constant 0 : i32
    %c0_i32_1 = arith.constant 0 : i32
    return %c0_i32, %c0_i32_0 : i32, i32
  }
  func.func @transform_4(%arg0: i32) -> (i32, i32) {
    %c0_i32 = arith.constant 0 : i32
    %c0_i32_0 = arith.constant 0 : i32
    %c0_i32_1 = arith.constant 0 : i32
    return %c0_i32, %c0_i32_0 : i32, i32
  }
  func.func @transform_5(%arg0: i32) -> (i32, i32) {
    %c0_i32 = arith.constant 0 : i32
    %c0_i32_0 = arith.constant 0 : i32
    return %c0_i32, %arg0 : i32, i32
  }
  func.func @transform_6(%arg0: i32) -> (i32, i32) {
    %c0_i32 = arith.constant 0 : i32
    %c0_i32_0 = arith.constant 0 : i32
    return %c0_i32, %arg0 : i32, i32
  }
}

</mosaic_0001>

<llo_original>
// kernel: tpu_custom_call.1
$region0: #{tpu_custom_call.1}
  #allocation0 [shape = 'u32[]', space=smem, size = 0x4, offset = 0x4, fixed_abs, tag = 'smem constant byte address 0x4 - core index']
  #allocation1 [shape = 'u32[144,128]{1,0:T(1,128)}', space=vmem, size = 0x12000, scoped, tag = 'internal scratch']
  %s0 = inlined_call_operand.vmem [shape: f32[8,32], index: 0, kind: input, shape index: {}]
  %s1 = inlined_call_operand.vmem [shape: f32[4,32], index: 1, kind: input, shape index: {}]
  %s2 = inlined_call_operand.vmem [shape: f32[72,16], index: 2, kind: input, shape index: {}]
  %s3 = inlined_call_operand.vmem [shape: f32[32,4], index: 3, kind: input, shape index: {}]
  %s4 = inlined_call_operand.vmem [shape: f32[112,1], index: 4, kind: input, shape index: {}]
  %s5 = inlined_call_operand.vmem [shape: f32[8,8], index: 5, kind: input, shape index: {}]
  %s6 = inlined_call_operand.vmem [shape: f32[48,8], index: 6, kind: output, shape index: {}]
  %s7 = sld [smem:[#allocation0]]
  $region34: #{tpu_custom_call.1} parent=0
    _
  %s9 = ssub.s32 1, %s7
  %s10 = scalar_select 0, %s9, %s7
  // Predicated region
  $region2: #{tpu_custom_call.1} parent=0 // pred_check
    _
  $region3: #{tpu_custom_call.1} parent=0 // pred_check_branch
    %12 = sbr.rel (0) target = $region5
  $region4: #{tpu_custom_call.1} parent=0 // pred_region
    _
  $region5: #{tpu_custom_call.1} parent=0 // pred_fallthru
    _
  // Predicated region
  $region6: #{tpu_custom_call.1} parent=0 // pred_check
    _
  $region7: #{tpu_custom_call.1} parent=0 // pred_check_branch
    %14 = sbr.rel (0) target = $region9
  $region8: #{tpu_custom_call.1} parent=0 // pred_region
    _
  $region9: #{tpu_custom_call.1} parent=0 // pred_fallthru
    _
  // Predicated region
  $region10: #{tpu_custom_call.1} parent=0 // pred_check
    _
  $region11: #{tpu_custom_call.1} parent=0 // pred_check_branch
    %16 = sbr.rel (0) target = $region13
  $region12: #{tpu_custom_call.1} parent=0 // pred_region
    _
  $region13: #{tpu_custom_call.1} parent=0 // pred_fallthru
    _
  // Predicated region
  $region14: #{tpu_custom_call.1} parent=0 // pred_check
    _
  $region15: #{tpu_custom_call.1} parent=0 // pred_check_branch
    %18 = sbr.rel (0) target = $region17
  $region16: #{tpu_custom_call.1} parent=0 // pred_region
    _
  $region17: #{tpu_custom_call.1} parent=0 // pred_fallthru
    _
  // Predicated region
  $region18: #{tpu_custom_call.1} parent=0 // pred_check
    _
  $region19: #{tpu_custom_call.1} parent=0 // pred_check_branch
    %20 = sbr.rel (0) target = $region21
  $region20: #{tpu_custom_call.1} parent=0 // pred_region
    _
  $region21: #{tpu_custom_call.1} parent=0 // pred_fallthru
    _
  // Predicated region
  $region22: #{tpu_custom_call.1} parent=0 // pred_check
    _
  $region23: #{tpu_custom_call.1} parent=0 // pred_check_branch
    %22 = sbr.rel (0) target = $region25
  $region24: #{tpu_custom_call.1} parent=0 // pred_region
    _
  $region25: #{tpu_custom_call.1} parent=0 // pred_fallthru
    _
  %v23 = vld [vmem:[%s1] sm:$0xf]
  %v24 = vld [vmem:[%s0] sm:$0xff]
  %v25 = vld [vmem:[%s4] sm:$0xf]
  %27 = vset.pattern.permute.xlu0 0
  %28 = vperm.xlu0 %27, %v25
  %v29 = vpop.permute.xlu0 %28
  %vm31 = vcmask 261120
  %v33 = vsel %vm31, %v23, 0
  %v36 = vsel %vm31, %v24, 0
  %38 = vmatprep.subr.mxu0 0.0
  %39 = vmatpush1.xpose.msra.mxu0 0.0
  %40 = vmatprep.subr.mxu0 0.0
  %41 = vmatpush1.xpose.msra.mxu0 0.0
  %42 = vmatprep.subr.mxu0 0.0
  %43 = vmatpush1.xpose.msra.mxu0 0.0
  %44 = vmatprep.subr.mxu0 0.0
  %45 = vmatpush1.xpose.msra.mxu0 0.0
  %46 = vmatprep.subr.mxu0 0.0
  %47 = vmatpush1.xpose.msra.mxu0 0.0
  %48 = vmatprep.subr.mxu0 0.0
  %49 = vmatpush1.xpose.msra.mxu0 0.0
  %50 = vmatprep.subr.mxu0 0.0
  %51 = vmatpush1.xpose.msra.mxu0 0.0
  %52 = vmatprep.subr.mxu0 0.0
  %53 = vmatpush1.xpose.msra.mxu0 0.0
  %54 = vmatprep.subr.mxu0 0.0
  %55 = vmatpush1.xpose.msra.mxu0 0.0
  %56 = vmatprep.subr.mxu0 0.0
  %57 = vmatpush1.xpose.msra.mxu0 0.0
  %58 = vmatprep.subr.mxu0 0.0
  %59 = vmatpush1.xpose.msra.mxu0 0.0
  %60 = vmatprep.subr.mxu0 0.0
  %61 = vmatpush1.xpose.msra.mxu0 0.0
  %62 = vmatprep.subr.mxu0 0.0
  %63 = vmatpush1.xpose.msra.mxu0 0.0
  %64 = vmatprep.subr.mxu0 0.0
  %65 = vmatpush1.xpose.msra.mxu0 0.0
  %66 = vmatprep.subr.mxu0 0.0
  %67 = vmatpush1.xpose.msra.mxu0 0.0
  %68 = vmatprep.subr.mxu0 0.0
  %69 = vmatpush1.xpose.msra.mxu0 %v36
  %70 = vmatprep.subr.mxu0 0.0
  %71 = vmatpush2.xpose.msra.mxu0 0.0
  %72 = vmatprep.subr.mxu0 0.0
  %73 = vmatpush2.xpose.msra.mxu0 0.0
  %74 = vmatprep.subr.mxu0 0.0
  %75 = vmatpush2.xpose.msra.mxu0 0.0
  %76 = vmatprep.subr.mxu0 0.0
  %77 = vmatpush2.xpose.msra.mxu0 0.0
  %78 = vmatprep.subr.mxu0 0.0
  %79 = vmatpush2.xpose.msra.mxu0 0.0
  %80 = vmatprep.subr.mxu0 0.0
  %81 = vmatpush2.xpose.msra.mxu0 0.0
  %82 = vmatprep.subr.mxu0 0.0
  %83 = vmatpush2.xpose.msra.mxu0 0.0
  %84 = vmatprep.subr.mxu0 0.0
  %85 = vmatpush2.xpose.msra.mxu0 0.0
  %86 = vmatprep.subr.mxu0 0.0
  %87 = vmatpush2.xpose.msra.mxu0 0.0
  %88 = vmatprep.subr.mxu0 0.0
  %89 = vmatpush2.xpose.msra.mxu0 0.0
  %90 = vmatprep.subr.mxu0 0.0
  %91 = vmatpush2.xpose.msra.mxu0 0.0
  %92 = vmatprep.subr.mxu0 0.0
  %93 = vmatpush2.xpose.msra.mxu0 0.0
  %94 = vmatprep.subr.mxu0 0.0
  %95 = vmatpush2.xpose.msra.mxu0 0.0
  %96 = vmatprep.subr.mxu0 0.0
  %97 = vmatpush2.xpose.msra.mxu0 0.0
  %98 = vmatprep.subr.mxu0 0.0
  %99 = vmatpush2.xpose.msra.mxu0 0.0
  %100 = vmatprep.subr.mxu0 0.0
  %101 = vmatpush2.xpose.msra.mxu0 0.0
  %102 = vmatprep.mubr.f32.mxu0 0.0
  %103 = vmatmul.mubr.f32.gmra.mxu0 %v33
  %v104 = vpop.f32.mrf.mxu0
  %v105 = vadd.f32 %v29, %v104
  %v106 = vpop.f32.mrf.mxu0
  %107 = vdwg.mxu0
  %v108 = vmax.f32 %v105, 0.0
  %v109 = vld [vmem:[%s2] sm:$0xf]
  %v110 = vld [vmem:[%s4 + $0x8] sm:$0xf]
  %112 = vset.pattern.permute.xlu0 0
  %113 = vperm.xlu0 %112, %v110
  %v114 = vpop.permute.xlu0 %113
  %vm116 = vcmask 31744
  %v118 = vsel %vm116, %v109, 0
  %vm120 = vcmask 1043456
  %v122 = vsel %vm120, %v108, 0
  %124 = vmatprep.subr.mxu0 0.0
  %125 = vmatpush1.msra.mxu0 0.0
  %126 = vmatprep.subr.mxu0 0.0
  %127 = vmatpush1.msra.mxu0 0.0
  %128 = vmatprep.subr.mxu0 0.0
  %129 = vmatpush1.msra.mxu0 0.0
  %130 = vmatprep.subr.mxu0 0.0
  %131 = vmatpush1.msra.mxu0 0.0
  %132 = vmatprep.subr.mxu0 0.0
  %133 = vmatpush1.msra.mxu0 0.0
  %134 = vmatprep.subr.mxu0 0.0
  %135 = vmatpush1.msra.mxu0 0.0
  %136 = vmatprep.subr.mxu0 0.0
  %137 = vmatpush1.msra.mxu0 0.0
  %138 = vmatprep.subr.mxu0 0.0
  %139 = vmatpush1.msra.mxu0 0.0
  %140 = vmatprep.subr.mxu0 0.0
  %141 = vmatpush1.msra.mxu0 0.0
  %142 = vmatprep.subr.mxu0 0.0
  %143 = vmatpush1.msra.mxu0 0.0
  %144 = vmatprep.subr.mxu0 0.0
  %145 = vmatpush1.msra.mxu0 0.0
  %146 = vmatprep.subr.mxu0 0.0
  %147 = vmatpush1.msra.mxu0 0.0
  %148 = vmatprep.subr.mxu0 0.0
  %149 = vmatpush1.msra.mxu0 0.0
  %150 = vmatprep.subr.mxu0 0.0
  %151 = vmatpush1.msra.mxu0 0.0
  %152 = vmatprep.subr.mxu0 0.0
  %153 = vmatpush1.msra.mxu0 0.0
  %154 = vmatprep.subr.mxu0 0.0
  %155 = vmatpush1.msra.mxu0 %v122
  %156 = vmatprep.subr.mxu0 0.0
  %157 = vmatpush2.msra.mxu0 0.0
  %158 = vmatprep.subr.mxu0 0.0
  %159 = vmatpush2.msra.mxu0 0.0
  %160 = vmatprep.subr.mxu0 0.0
  %161 = vmatpush2.msra.mxu0 0.0
  %162 = vmatprep.subr.mxu0 0.0
  %163 = vmatpush2.msra.mxu0 0.0
  %164 = vmatprep.subr.mxu0 0.0
  %165 = vmatpush2.msra.mxu0 0.0
  %166 = vmatprep.subr.mxu0 0.0
  %167 = vmatpush2.msra.mxu0 0.0
  %168 = vmatprep.subr.mxu0 0.0
  %169 = vmatpush2.msra.mxu0 0.0
  %170 = vmatprep.subr.mxu0 0.0
  %171 = vmatpush2.msra.mxu0 0.0
  %172 = vmatprep.subr.mxu0 0.0
  %173 = vmatpush2.msra.mxu0 0.0
  %174 = vmatprep.subr.mxu0 0.0
  %175 = vmatpush2.msra.mxu0 0.0
  %176 = vmatprep.subr.mxu0 0.0
  %177 = vmatpush2.msra.mxu0 0.0
  %178 = vmatprep.subr.mxu0 0.0
  %179 = vmatpush2.msra.mxu0 0.0
  %180 = vmatprep.subr.mxu0 0.0
  %181 = vmatpush2.msra.mxu0 0.0
  %182 = vmatprep.subr.mxu0 0.0
  %183 = vmatpush2.msra.mxu0 0.0
  %184 = vmatprep.subr.mxu0 0.0
  %185 = vmatpush2.msra.mxu0 0.0
  %186 = vmatprep.subr.mxu0 0.0
  %187 = vmatpush2.msra.mxu0 0.0
  %188 = vmatprep.mubr.f32.mxu0 0.0
  %189 = vmatmul.mubr.f32.gmra.mxu0 %v118
  %v190 = vpop.f32.mrf.mxu0
  %v191 = vadd.f32 %v114, %v190
  %v192 = vpop.f32.mrf.mxu0
  %193 = vdwg.mxu0
  %v194 = vmax.f32 %v191, 0.0
  %v195 = vld [vmem:[%s2 + $0x8] sm:$0xff]
  %v196 = vld [vmem:[%s2 + $0x10] sm:$0xff]
  %v197 = vld [vmem:[%s4 + $0x10] sm:$0xff]
  %v198 = vld [vmem:[%s4 + $0x18] sm:$0xff]
  %200 = vset.pattern.permute.xlu0 0
  %201 = vperm.xlu0 %200, %v197
  %v202 = vpop.permute.xlu0 %201
  %205 = vset.pattern.permute.xlu0 0
  %206 = vperm.xlu0 %205, %v198
  %v207 = vpop.permute.xlu0 %206
  %v210 = vsel %vm116, %v195, 0
  %v213 = vsel %vm116, %v196, 0
  %v216 = vsel %vm120, %v194, 0
  %218 = vmatprep.subr.mxu0 0.0
  %219 = vmatpush1.msra.mxu0 0.0
  %220 = vmatprep.subr.mxu0 0.0
  %221 = vmatpush1.msra.mxu0 0.0
  %222 = vmatprep.subr.mxu0 0.0
  %223 = vmatpush1.msra.mxu0 0.0
  %224 = vmatprep.subr.mxu0 0.0
  %225 = vmatpush1.msra.mxu0 0.0
  %226 = vmatprep.subr.mxu0 0.0
  %227 = vmatpush1.msra.mxu0 0.0
  %228 = vmatprep.subr.mxu0 0.0
  %229 = vmatpush1.msra.mxu0 0.0
  %230 = vmatprep.subr.mxu0 0.0
  %231 = vmatpush1.msra.mxu0 0.0
  %232 = vmatprep.subr.mxu0 0.0
  %233 = vmatpush1.msra.mxu0 0.0
  %234 = vmatprep.subr.mxu0 0.0
  %235 = vmatpush1.msra.mxu0 0.0
  %236 = vmatprep.subr.mxu0 0.0
  %237 = vmatpush1.msra.mxu0 0.0
  %238 = vmatprep.subr.mxu0 0.0
  %239 = vmatpush1.msra.mxu0 0.0
  %240 = vmatprep.subr.mxu0 0.0
  %241 = vmatpush1.msra.mxu0 0.0
  %242 = vmatprep.subr.mxu0 0.0
  %243 = vmatpush1.msra.mxu0 0.0
  %244 = vmatprep.subr.mxu0 0.0
  %245 = vmatpush1.msra.mxu0 0.0
  %246 = vmatprep.subr.mxu0 0.0
  %247 = vmatpush1.msra.mxu0 0.0
  %248 = vmatprep.subr.mxu0 0.0
  %249 = vmatpush1.msra.mxu0 %v216
  %250 = vmatprep.subr.mxu0 0.0
  %251 = vmatpush2.msra.mxu0 0.0
  %252 = vmatprep.subr.mxu0 0.0
  %253 = vmatpush2.msra.mxu0 0.0
  %254 = vmatprep.subr.mxu0 0.0
  %255 = vmatpush2.msra.mxu0 0.0
  %256 = vmatprep.subr.mxu0 0.0
  %257 = vmatpush2.msra.mxu0 0.0
  %258 = vmatprep.subr.mxu0 0.0
  %259 = vmatpush2.msra.mxu0 0.0
  %260 = vmatprep.subr.mxu0 0.0
  %261 = vmatpush2.msra.mxu0 0.0
  %262 = vmatprep.subr.mxu0 0.0
  %263 = vmatpush2.msra.mxu0 0.0
  %264 = vmatprep.subr.mxu0 0.0
  %265 = vmatpush2.msra.mxu0 0.0
  %266 = vmatprep.subr.mxu0 0.0
  %267 = vmatpush2.msra.mxu0 0.0
  %268 = vmatprep.subr.mxu0 0.0
  %269 = vmatpush2.msra.mxu0 0.0
  %270 = vmatprep.subr.mxu0 0.0
  %271 = vmatpush2.msra.mxu0 0.0
  %272 = vmatprep.subr.mxu0 0.0
  %273 = vmatpush2.msra.mxu0 0.0
  %274 = vmatprep.subr.mxu0 0.0
  %275 = vmatpush2.msra.mxu0 0.0
  %276 = vmatprep.subr.mxu0 0.0
  %277 = vmatpush2.msra.mxu0 0.0
  %278 = vmatprep.subr.mxu0 0.0
  %279 = vmatpush2.msra.mxu0 0.0
  %280 = vmatprep.subr.mxu0 0.0
  %281 = vmatpush2.msra.mxu0 0.0
  %282 = vmatprep.mubr.f32.mxu0 0.0
  %283 = vmatmul.mubr.f32.gmra.mxu0 %v210
  %v284 = vpop.f32.mrf.mxu0
  %v285 = vadd.f32 %v202, %v284
  %v286 = vpop.f32.mrf.mxu0
  %287 = vmatprep.mubr.f32.mxu0 0.0
  %288 = vmatmul.mubr.f32.gmra.mxu0 %v213
  %v289 = vpop.f32.mrf.mxu0
  %v290 = vadd.f32 %v207, %v289
  %v291 = vpop.f32.mrf.mxu0
  %292 = vdwg.mxu0
  %v293 = vmax.f32 %v285, 0.0
  %v294 = vmax.f32 %v290, 0.0
  %v295 = vld [vmem:[%s2 + $0x18] sm:$0xff]
  %v296 = vld [vmem:[%s2 + $0x20] sm:$0xff]
  %v297 = vld [vmem:[%s4 + $0x20] sm:$0xff]
  %v298 = vld [vmem:[%s4 + $0x28] sm:$0xff]
  %300 = vset.pattern.permute.xlu0 0
  %301 = vperm.xlu0 %300, %v297
  %v302 = vpop.permute.xlu0 %301
  %305 = vset.pattern.permute.xlu0 0
  %306 = vperm.xlu0 %305, %v298
  %v307 = vpop.permute.xlu0 %306
  %vm309 = vcmask 130048
  %v311 = vsel %vm309, %v295, 0
  %v314 = vsel %vm309, %v296, 0
  %316 = vmatprep.subr.mxu0 0.0
  %317 = vmatpush1.msra.mxu0 0.0
  %318 = vmatprep.subr.mxu0 0.0
  %319 = vmatpush1.msra.mxu0 0.0
  %320 = vmatprep.subr.mxu0 0.0
  %321 = vmatpush1.msra.mxu0 0.0
  %322 = vmatprep.subr.mxu0 0.0
  %323 = vmatpush1.msra.mxu0 0.0
  %324 = vmatprep.subr.mxu0 0.0
  %325 = vmatpush1.msra.mxu0 0.0
  %326 = vmatprep.subr.mxu0 0.0
  %327 = vmatpush1.msra.mxu0 0.0
  %328 = vmatprep.subr.mxu0 0.0
  %329 = vmatpush1.msra.mxu0 0.0
  %330 = vmatprep.subr.mxu0 0.0
  %331 = vmatpush1.msra.mxu0 0.0
  %332 = vmatprep.subr.mxu0 0.0
  %333 = vmatpush1.msra.mxu0 0.0
  %334 = vmatprep.subr.mxu0 0.0
  %335 = vmatpush1.msra.mxu0 0.0
  %336 = vmatprep.subr.mxu0 0.0
  %337 = vmatpush1.msra.mxu0 0.0
  %338 = vmatprep.subr.mxu0 0.0
  %339 = vmatpush1.msra.mxu0 0.0
  %340 = vmatprep.subr.mxu0 0.0
  %341 = vmatpush1.msra.mxu0 0.0
  %342 = vmatprep.subr.mxu0 0.0
  %343 = vmatpush1.msra.mxu0 0.0
  %344 = vmatprep.subr.mxu0 0.0
  %345 = vmatpush1.msra.mxu0 %v294
  %346 = vmatprep.subr.mxu0 0.0
  %347 = vmatpush1.msra.mxu0 %v293
  %348 = vmatprep.subr.mxu0 0.0
  %349 = vmatpush2.msra.mxu0 0.0
  %350 = vmatprep.subr.mxu0 0.0
  %351 = vmatpush2.msra.mxu0 0.0
  %352 = vmatprep.subr.mxu0 0.0
  %353 = vmatpush2.msra.mxu0 0.0
  %354 = vmatprep.subr.mxu0 0.0
  %355 = vmatpush2.msra.mxu0 0.0
  %356 = vmatprep.subr.mxu0 0.0
  %357 = vmatpush2.msra.mxu0 0.0
  %358 = vmatprep.subr.mxu0 0.0
  %359 = vmatpush2.msra.mxu0 0.0
  %360 = vmatprep.subr.mxu0 0.0
  %361 = vmatpush2.msra.mxu0 0.0
  %362 = vmatprep.subr.mxu0 0.0
  %363 = vmatpush2.msra.mxu0 0.0
  %364 = vmatprep.subr.mxu0 0.0
  %365 = vmatpush2.msra.mxu0 0.0
  %366 = vmatprep.subr.mxu0 0.0
  %367 = vmatpush2.msra.mxu0 0.0
  %368 = vmatprep.subr.mxu0 0.0
  %369 = vmatpush2.msra.mxu0 0.0
  %370 = vmatprep.subr.mxu0 0.0
  %371 = vmatpush2.msra.mxu0 0.0
  %372 = vmatprep.subr.mxu0 0.0
  %373 = vmatpush2.msra.mxu0 0.0
  %374 = vmatprep.subr.mxu0 0.0
  %375 = vmatpush2.msra.mxu0 0.0
  %376 = vmatprep.subr.mxu0 0.0
  %377 = vmatpush2.msra.mxu0 0.0
  %378 = vmatprep.subr.mxu0 0.0
  %379 = vmatpush2.msra.mxu0 0.0
  %380 = vmatprep.mubr.f32.mxu0 0.0
  %381 = vmatmul.mubr.f32.gmra.mxu0 %v311
  %v382 = vpop.f32.mrf.mxu0
  %v383 = vadd.f32 %v302, %v382
  %v384 = vpop.f32.mrf.mxu0
  %385 = vmatprep.mubr.f32.mxu0 0.0
  %386 = vmatmul.mubr.f32.gmra.mxu0 %v314
  %v387 = vpop.f32.mrf.mxu0
  %v388 = vadd.f32 %v307, %v387
  %v389 = vpop.f32.mrf.mxu0
  %390 = vdwg.mxu0
  %v391 = vld [vmem:[%s5] sm:$0xff]
  %v392 = vmul.f32 %v388, 0.5
  %v393 = vmul.f32 %v392, 1.442695
  %v394 = vpow.pop %v393
  %v395 = vmul.f32 %v391, %v394
  %v396 = vadd.f32 %v383, %v395
  %v397 = vld [vmem:[%s2 + $0x28] sm:$0xff]
  %v398 = vld [vmem:[%s2 + $0x30] sm:$0xff]
  %v399 = vld [vmem:[%s4 + $0x30] sm:$0xff]
  %v400 = vld [vmem:[%s4 + $0x38] sm:$0xff]
  %402 = vset.pattern.permute.xlu0 0
  %403 = vperm.xlu0 %402, %v399
  %v404 = vpop.permute.xlu0 %403
  %407 = vset.pattern.permute.xlu0 0
  %408 = vperm.xlu0 %407, %v400
  %v409 = vpop.permute.xlu0 %408
  %vm411 = vcmask 64512
  %v413 = vsel %vm411, %v397, 0
  %v416 = vsel %vm411, %v398, 0
  %418 = vmatprep.subr.mxu0 0.0
  %419 = vmatpush1.msra.mxu0 0.0
  %420 = vmatprep.subr.mxu0 0.0
  %421 = vmatpush1.msra.mxu0 0.0
  %422 = vmatprep.subr.mxu0 0.0
  %423 = vmatpush1.msra.mxu0 0.0
  %424 = vmatprep.subr.mxu0 0.0
  %425 = vmatpush1.msra.mxu0 0.0
  %426 = vmatprep.subr.mxu0 0.0
  %427 = vmatpush1.msra.mxu0 0.0
  %428 = vmatprep.subr.mxu0 0.0
  %429 = vmatpush1.msra.mxu0 0.0
  %430 = vmatprep.subr.mxu0 0.0
  %431 = vmatpush1.msra.mxu0 0.0
  %432 = vmatprep.subr.mxu0 0.0
  %433 = vmatpush1.msra.mxu0 0.0
  %434 = vmatprep.subr.mxu0 0.0
  %435 = vmatpush1.msra.mxu0 0.0
  %436 = vmatprep.subr.mxu0 0.0
  %437 = vmatpush1.msra.mxu0 0.0
  %438 = vmatprep.subr.mxu0 0.0
  %439 = vmatpush1.msra.mxu0 0.0
  %440 = vmatprep.subr.mxu0 0.0
  %441 = vmatpush1.msra.mxu0 0.0
  %442 = vmatprep.subr.mxu0 0.0
  %443 = vmatpush1.msra.mxu0 0.0
  %444 = vmatprep.subr.mxu0 0.0
  %445 = vmatpush1.msra.mxu0 0.0
  %446 = vmatprep.subr.mxu0 0.0
  %447 = vmatpush1.msra.mxu0 0.0
  %448 = vmatprep.subr.mxu0 0.0
  %449 = vmatpush1.msra.mxu0 %v396
  %450 = vmatprep.subr.mxu0 0.0
  %451 = vmatpush2.msra.mxu0 0.0
  %452 = vmatprep.subr.mxu0 0.0
  %453 = vmatpush2.msra.mxu0 0.0
  %454 = vmatprep.subr.mxu0 0.0
  %455 = vmatpush2.msra.mxu0 0.0
  %456 = vmatprep.subr.mxu0 0.0
  %457 = vmatpush2.msra.mxu0 0.0
  %458 = vmatprep.subr.mxu0 0.0
  %459 = vmatpush2.msra.mxu0 0.0
  %460 = vmatprep.subr.mxu0 0.0
  %461 = vmatpush2.msra.mxu0 0.0
  %462 = vmatprep.subr.mxu0 0.0
  %463 = vmatpush2.msra.mxu0 0.0
  %464 = vmatprep.subr.mxu0 0.0
  %465 = vmatpush2.msra.mxu0 0.0
  %466 = vmatprep.subr.mxu0 0.0
  %467 = vmatpush2.msra.mxu0 0.0
  %468 = vmatprep.subr.mxu0 0.0
  %469 = vmatpush2.msra.mxu0 0.0
  %470 = vmatprep.subr.mxu0 0.0
  %471 = vmatpush2.msra.mxu0 0.0
  %472 = vmatprep.subr.mxu0 0.0
  %473 = vmatpush2.msra.mxu0 0.0
  %474 = vmatprep.subr.mxu0 0.0
  %475 = vmatpush2.msra.mxu0 0.0
  %476 = vmatprep.subr.mxu0 0.0
  %477 = vmatpush2.msra.mxu0 0.0
  %478 = vmatprep.subr.mxu0 0.0
  %479 = vmatpush2.msra.mxu0 0.0
  %480 = vmatprep.subr.mxu0 0.0
  %481 = vmatpush2.msra.mxu0 0.0
  %482 = vmatprep.mubr.f32.mxu0 0.0
  %483 = vmatmul.mubr.f32.gmra.mxu0 %v413
  %v484 = vpop.f32.mrf.mxu0
  %v485 = vadd.f32 %v404, %v484
  %v486 = vpop.f32.mrf.mxu0
  %487 = vmatprep.mubr.f32.mxu0 0.0
  %488 = vmatmul.mubr.f32.gmra.mxu0 %v416
  %v489 = vpop.f32.mrf.mxu0
  %v490 = vadd.f32 %v409, %v489
  %v491 = vpop.f32.mrf.mxu0
  %492 = vdwg.mxu0
  %v493 = vmax.f32 %v485, 0.0
  %v494 = vmax.f32 %v490, 0.0
  %v495 = vld [vmem:[%s2 + $0x38] sm:$0xf]
  %v496 = vld [vmem:[%s4 + $0x40] sm:$0xf]
  %498 = vset.pattern.permute.xlu0 0
  %499 = vperm.xlu0 %498, %v496
  %v500 = vpop.permute.xlu0 %499
  %v503 = vsel %vm309, %v495, 0
  %505 = vmatprep.subr.mxu0 0.0
  %506 = vmatpush1.msra.mxu0 0.0
  %507 = vmatprep.subr.mxu0 0.0
  %508 = vmatpush1.msra.mxu0 0.0
  %509 = vmatprep.subr.mxu0 0.0
  %510 = vmatpush1.msra.mxu0 0.0
  %511 = vmatprep.subr.mxu0 0.0
  %512 = vmatpush1.msra.mxu0 0.0
  %513 = vmatprep.subr.mxu0 0.0
  %514 = vmatpush1.msra.mxu0 0.0
  %515 = vmatprep.subr.mxu0 0.0
  %516 = vmatpush1.msra.mxu0 0.0
  %517 = vmatprep.subr.mxu0 0.0
  %518 = vmatpush1.msra.mxu0 0.0
  %519 = vmatprep.subr.mxu0 0.0
  %520 = vmatpush1.msra.mxu0 0.0
  %521 = vmatprep.subr.mxu0 0.0
  %522 = vmatpush1.msra.mxu0 0.0
  %523 = vmatprep.subr.mxu0 0.0
  %524 = vmatpush1.msra.mxu0 0.0
  %525 = vmatprep.subr.mxu0 0.0
  %526 = vmatpush1.msra.mxu0 0.0
  %527 = vmatprep.subr.mxu0 0.0
  %528 = vmatpush1.msra.mxu0 0.0
  %529 = vmatprep.subr.mxu0 0.0
  %530 = vmatpush1.msra.mxu0 0.0
  %531 = vmatprep.subr.mxu0 0.0
  %532 = vmatpush1.msra.mxu0 0.0
  %533 = vmatprep.subr.mxu0 0.0
  %534 = vmatpush1.msra.mxu0 %v494
  %535 = vmatprep.subr.mxu0 0.0
  %536 = vmatpush1.msra.mxu0 %v493
  %537 = vmatprep.subr.mxu0 0.0
  %538 = vmatpush2.msra.mxu0 0.0
  %539 = vmatprep.subr.mxu0 0.0
  %540 = vmatpush2.msra.mxu0 0.0
  %541 = vmatprep.subr.mxu0 0.0
  %542 = vmatpush2.msra.mxu0 0.0
  %543 = vmatprep.subr.mxu0 0.0
  %544 = vmatpush2.msra.mxu0 0.0
  %545 = vmatprep.subr.mxu0 0.0
  %546 = vmatpush2.msra.mxu0 0.0
  %547 = vmatprep.subr.mxu0 0.0
  %548 = vmatpush2.msra.mxu0 0.0
  %549 = vmatprep.subr.mxu0 0.0
  %550 = vmatpush2.msra.mxu0 0.0
  %551 = vmatprep.subr.mxu0 0.0
  %552 = vmatpush2.msra.mxu0 0.0
  %553 = vmatprep.subr.mxu0 0.0
  %554 = vmatpush2.msra.mxu0 0.0
  %555 = vmatprep.subr.mxu0 0.0
  %556 = vmatpush2.msra.mxu0 0.0
  %557 = vmatprep.subr.mxu0 0.0
  %558 = vmatpush2.msra.mxu0 0.0
  %559 = vmatprep.subr.mxu0 0.0
  %560 = vmatpush2.msra.mxu0 0.0
  %561 = vmatprep.subr.mxu0 0.0
  %562 = vmatpush2.msra.mxu0 0.0
  %563 = vmatprep.subr.mxu0 0.0
  %564 = vmatpush2.msra.mxu0 0.0
  %565 = vmatprep.subr.mxu0 0.0
  %566 = vmatpush2.msra.mxu0 0.0
  %567 = vmatprep.subr.mxu0 0.0
  %568 = vmatpush2.msra.mxu0 0.0
  %569 = vmatprep.mubr.f32.mxu0 0.0
  %570 = vmatmul.mubr.f32.gmra.mxu0 %v503
  %v571 = vpop.f32.mrf.mxu0
  %v572 = vadd.f32 %v500, %v571
  %v573 = vpop.f32.mrf.mxu0
  %574 = vdwg.mxu0
  %v575 = vmax.f32 %v572, 0.0
  %v576 = vld [vmem:[%s2 + $0x40] sm:$0xf]
  %v577 = vld [vmem:[%s4 + $0x48] sm:$0xf]
  %579 = vset.pattern.permute.xlu0 0
  %580 = vperm.xlu0 %579, %v577
  %v581 = vpop.permute.xlu0 %580
  %v584 = vsel %vm116, %v576, 0
  %v587 = vsel %vm120, %v575, 0
  %589 = vmatprep.subr.mxu0 0.0
  %590 = vmatpush1.msra.mxu0 0.0
  %591 = vmatprep.subr.mxu0 0.0
  %592 = vmatpush1.msra.mxu0 0.0
  %593 = vmatprep.subr.mxu0 0.0
  %594 = vmatpush1.msra.mxu0 0.0
  %595 = vmatprep.subr.mxu0 0.0
  %596 = vmatpush1.msra.mxu0 0.0
  %597 = vmatprep.subr.mxu0 0.0
  %598 = vmatpush1.msra.mxu0 0.0
  %599 = vmatprep.subr.mxu0 0.0
  %600 = vmatpush1.msra.mxu0 0.0
  %601 = vmatprep.subr.mxu0 0.0
  %602 = vmatpush1.msra.mxu0 0.0
  %603 = vmatprep.subr.mxu0 0.0
  %604 = vmatpush1.msra.mxu0 0.0
  %605 = vmatprep.subr.mxu0 0.0
  %606 = vmatpush1.msra.mxu0 0.0
  %607 = vmatprep.subr.mxu0 0.0
  %608 = vmatpush1.msra.mxu0 0.0
  %609 = vmatprep.subr.mxu0 0.0
  %610 = vmatpush1.msra.mxu0 0.0
  %611 = vmatprep.subr.mxu0 0.0
  %612 = vmatpush1.msra.mxu0 0.0
  %613 = vmatprep.subr.mxu0 0.0
  %614 = vmatpush1.msra.mxu0 0.0
  %615 = vmatprep.subr.mxu0 0.0
  %616 = vmatpush1.msra.mxu0 0.0
  %617 = vmatprep.subr.mxu0 0.0
  %618 = vmatpush1.msra.mxu0 0.0
  %619 = vmatprep.subr.mxu0 0.0
  %620 = vmatpush1.msra.mxu0 %v587
  %621 = vmatprep.subr.mxu0 0.0
  %622 = vmatpush2.msra.mxu0 0.0
  %623 = vmatprep.subr.mxu0 0.0
  %624 = vmatpush2.msra.mxu0 0.0
  %625 = vmatprep.subr.mxu0 0.0
  %626 = vmatpush2.msra.mxu0 0.0
  %627 = vmatprep.subr.mxu0 0.0
  %628 = vmatpush2.msra.mxu0 0.0
  %629 = vmatprep.subr.mxu0 0.0
  %630 = vmatpush2.msra.mxu0 0.0
  %631 = vmatprep.subr.mxu0 0.0
  %632 = vmatpush2.msra.mxu0 0.0
  %633 = vmatprep.subr.mxu0 0.0
  %634 = vmatpush2.msra.mxu0 0.0
  %635 = vmatprep.subr.mxu0 0.0
  %636 = vmatpush2.msra.mxu0 0.0
  %637 = vmatprep.subr.mxu0 0.0
  %638 = vmatpush2.msra.mxu0 0.0
  %639 = vmatprep.subr.mxu0 0.0
  %640 = vmatpush2.msra.mxu0 0.0
  %641 = vmatprep.subr.mxu0 0.0
  %642 = vmatpush2.msra.mxu0 0.0
  %643 = vmatprep.subr.mxu0 0.0
  %644 = vmatpush2.msra.mxu0 0.0
  %645 = vmatprep.subr.mxu0 0.0
  %646 = vmatpush2.msra.mxu0 0.0
  %647 = vmatprep.subr.mxu0 0.0
  %648 = vmatpush2.msra.mxu0 0.0
  %649 = vmatprep.subr.mxu0 0.0
  %650 = vmatpush2.msra.mxu0 0.0
  %651 = vmatprep.subr.mxu0 0.0
  %652 = vmatpush2.msra.mxu0 0.0
  %653 = vmatprep.mubr.f32.mxu0 0.0
  %654 = vmatmul.mubr.f32.gmra.mxu0 %v584
  %v655 = vpop.f32.mrf.mxu0
  %v656 = vadd.f32 %v581, %v655
  %v657 = vpop.f32.mrf.mxu0
  %658 = vdwg.mxu0
  %v659 = vmax.f32 %v656, 0.0
  %v660 = vld [vmem:[%s3] sm:$0xff]
  %v661 = vld [vmem:[%s3 + $0x8] sm:$0xff]
  %v662 = vld [vmem:[%s3 + $0x10] sm:$0xff]
  %v663 = vld [vmem:[%s3 + $0x18] sm:$0xff]
  %v664 = vld [vmem:[%s4 + $0x50] sm:$0xff]
  %v665 = vld [vmem:[%s4 + $0x58] sm:$0xff]
  %v666 = vld [vmem:[%s4 + $0x60] sm:$0xff]
  %v667 = vld [vmem:[%s4 + $0x68] sm:$0xff]
  %669 = vset.pattern.permute.xlu0 0
  %670 = vperm.xlu0 %669, %v664
  %v671 = vpop.permute.xlu0 %670
  %674 = vset.pattern.permute.xlu0 0
  %675 = vperm.xlu0 %674, %v665
  %v676 = vpop.permute.xlu0 %675
  %679 = vset.pattern.permute.xlu0 0
  %680 = vperm.xlu0 %679, %v666
  %v681 = vpop.permute.xlu0 %680
  %684 = vset.pattern.permute.xlu0 0
  %685 = vperm.xlu0 %684, %v667
  %v686 = vpop.permute.xlu0 %685
  %v689 = vsel %vm116, %v660, 0
  %v692 = vsel %vm116, %v661, 0
  %v695 = vsel %vm116, %v662, 0
  %v698 = vsel %vm116, %v663, 0
  %v701 = vsel %vm120, %v659, 0
  %703 = vmatprep.subr.mxu0 0.0
  %704 = vmatpush1.msra.mxu0 0.0
  %705 = vmatprep.subr.mxu0 0.0
  %706 = vmatpush1.msra.mxu0 0.0
  %707 = vmatprep.subr.mxu0 0.0
  %708 = vmatpush1.msra.mxu0 0.0
  %709 = vmatprep.subr.mxu0 0.0
  %710 = vmatpush1.msra.mxu0 0.0
  %711 = vmatprep.subr.mxu0 0.0
  %712 = vmatpush1.msra.mxu0 0.0
  %713 = vmatprep.subr.mxu0 0.0
  %714 = vmatpush1.msra.mxu0 0.0
  %715 = vmatprep.subr.mxu0 0.0
  %716 = vmatpush1.msra.mxu0 0.0
  %717 = vmatprep.subr.mxu0 0.0
  %718 = vmatpush1.msra.mxu0 0.0
  %719 = vmatprep.subr.mxu0 0.0
  %720 = vmatpush1.msra.mxu0 0.0
  %721 = vmatprep.subr.mxu0 0.0
  %722 = vmatpush1.msra.mxu0 0.0
  %723 = vmatprep.subr.mxu0 0.0
  %724 = vmatpush1.msra.mxu0 0.0
  %725 = vmatprep.subr.mxu0 0.0
  %726 = vmatpush1.msra.mxu0 0.0
  %727 = vmatprep.subr.mxu0 0.0
  %728 = vmatpush1.msra.mxu0 0.0
  %729 = vmatprep.subr.mxu0 0.0
  %730 = vmatpush1.msra.mxu0 0.0
  %731 = vmatprep.subr.mxu0 0.0
  %732 = vmatpush1.msra.mxu0 0.0
  %733 = vmatprep.subr.mxu0 0.0
  %734 = vmatpush1.msra.mxu0 %v701
  %735 = vmatprep.subr.mxu0 0.0
  %736 = vmatpush2.msra.mxu0 0.0
  %737 = vmatprep.subr.mxu0 0.0
  %738 = vmatpush2.msra.mxu0 0.0
  %739 = vmatprep.subr.mxu0 0.0
  %740 = vmatpush2.msra.mxu0 0.0
  %741 = vmatprep.subr.mxu0 0.0
  %742 = vmatpush2.msra.mxu0 0.0
  %743 = vmatprep.subr.mxu0 0.0
  %744 = vmatpush2.msra.mxu0 0.0
  %745 = vmatprep.subr.mxu0 0.0
  %746 = vmatpush2.msra.mxu0 0.0
  %747 = vmatprep.subr.mxu0 0.0
  %748 = vmatpush2.msra.mxu0 0.0
  %749 = vmatprep.subr.mxu0 0.0
  %750 = vmatpush2.msra.mxu0 0.0
  %751 = vmatprep.subr.mxu0 0.0
  %752 = vmatpush2.msra.mxu0 0.0
  %753 = vmatprep.subr.mxu0 0.0
  %754 = vmatpush2.msra.mxu0 0.0
  %755 = vmatprep.subr.mxu0 0.0
  %756 = vmatpush2.msra.mxu0 0.0
  %757 = vmatprep.subr.mxu0 0.0
  %758 = vmatpush2.msra.mxu0 0.0
  %759 = vmatprep.subr.mxu0 0.0
  %760 = vmatpush2.msra.mxu0 0.0
  %761 = vmatprep.subr.mxu0 0.0
  %762 = vmatpush2.msra.mxu0 0.0
  %763 = vmatprep.subr.mxu0 0.0
  %764 = vmatpush2.msra.mxu0 0.0
  %765 = vmatprep.subr.mxu0 0.0
  %766 = vmatpush2.msra.mxu0 0.0
  %767 = vmatprep.mubr.f32.mxu0 0.0
  %768 = vmatmul.mubr.f32.gmra.mxu0 %v689
  %v769 = vpop.f32.mrf.mxu0
  %v770 = vadd.f32 %v671, %v769
  %v771 = vpop.f32.mrf.mxu0
  %772 = vmatprep.mubr.f32.mxu0 0.0
  %773 = vmatmul.mubr.f32.gmra.mxu0 %v692
  %v774 = vpop.f32.mrf.mxu0
  %v775 = vadd.f32 %v676, %v774
  %v776 = vpop.f32.mrf.mxu0
  %777 = vmatprep.mubr.f32.mxu0 0.0
  %778 = vmatmul.mubr.f32.gmra.mxu0 %v695
  %v779 = vpop.f32.mrf.mxu0
  %v780 = vadd.f32 %v681, %v779
  %v781 = vpop.f32.mrf.mxu0
  %782 = vmatprep.mubr.f32.mxu0 0.0
  %783 = vmatmul.mubr.f32.gmra.mxu0 %v698
  %v784 = vpop.f32.mrf.mxu0
  %v785 = vadd.f32 %v686, %v784
  %v786 = vpop.f32.mrf.mxu0
  %787 = vdwg.mxu0
  %v788 = vsub.f32 0.0, %v770
  %v789 = vsub.f32 0.0, %v775
  %v790 = vsub.f32 0.0, %v780
  %v791 = vsub.f32 0.0, %v785
  %v792 = vmul.f32 %v788, 1.442695
  %v793 = vpow.pop %v792
  %v794 = vmul.f32 %v789, 1.442695
  %v795 = vpow.pop %v794
  %v796 = vmul.f32 %v790, 1.442695
  %v797 = vpow.pop %v796
  %v798 = vmul.f32 %v791, 1.442695
  %v799 = vpow.pop %v798
  %v800 = vadd.f32 %v793, 1.0
  %v801 = vadd.f32 %v795, 1.0
  %v802 = vadd.f32 %v797, 1.0
  %v803 = vadd.f32 %v799, 1.0
  %v804 = vrcp.pop %v800
  %v805 = vmul.f32 1.0, %v804
  %v806 = vrcp.pop %v801
  %v807 = vmul.f32 1.0, %v806
  %v808 = vrcp.pop %v802
  %v809 = vmul.f32 1.0, %v808
  %v810 = vrcp.pop %v803
  %v811 = vmul.f32 1.0, %v810
  %812 = vst.msk [vmem:[%s6] sm:$0xff] %vm411, %v805
  %813 = vst.msk [vmem:[%s6 + $0x8] sm:$0xff] %vm411, %v807
  %814 = vst.msk [vmem:[%s6 + $0x10] sm:$0xff] %vm411, %v809
  %815 = vst.msk [vmem:[%s6 + $0x18] sm:$0xff] %vm411, %v811
  %816 = vst.msk [vmem:[%s6 + $0x20] sm:$0xff] %vm411, %v383
  %817 = vst.msk [vmem:[%s6 + $0x28] sm:$0xff] %vm411, %v388
  // Predicated region
  $region26: #{tpu_custom_call.1} parent=0 // pred_check
    _
  $region27: #{tpu_custom_call.1} parent=0 // pred_check_branch
    %819 = sbr.rel (0) target = $region29
  $region28: #{tpu_custom_call.1} parent=0 // pred_region
    _
  $region29: #{tpu_custom_call.1} parent=0 // pred_fallthru
    _
  // Predicated region
  $region30: #{tpu_custom_call.1} parent=0 // pred_check
    _
  $region31: #{tpu_custom_call.1} parent=0 // pred_check_branch
    %821 = sbr.rel (0) target = $region33
  $region32: #{tpu_custom_call.1} parent=0 // pred_region
    _
  $region33: #{tpu_custom_call.1} parent=0 // pred_fallthru
    _

</llo_original>
